<compile_context>
chip_gen: v6e
topology: v6e:2x2x1
jax: 0.10.0
libtpu: 0.0.40
codegen_flags: <defaults>
</compile_context>

<pallas_src>
import functools

import jax
import jax.numpy as jnp
from jax import lax
from jax.experimental import pallas as pl
from jax.experimental.pallas import tpu as pltpu


def sbert_kernel(x_ref, w_ref, b_ref, o_ref, acc_ref, *, s_total):
    """One (batch-tile, seq-tile) grid step.

    x_ref  : (2, TB, TS, D) bf16  stacked (sent1, sent2) embedded token tile
    w_ref  : (D, H)         bf16  encoder weight (VMEM resident)
    b_ref  : (1, H)         f32   encoder bias   (VMEM resident)
    o_ref  : (1, 1, TB)     f32   cosine similarity, batch on the lane axis
    acc_ref: (2*TB, H)      f32   running max-pool accumulator (scratch)
    """
    _, TB, TS, D = x_ref.shape
    H = w_ref.shape[1]
    k = pl.program_id(1)

    @pl.when(k == 0)
    def _():
        acc_ref[...] = jnp.full_like(acc_ref, -jnp.inf)

    # ---- Single MXU matmul per step for both sentences: (2*TB*TS, D)@(D, H).
    # bf16 operands, f32 accumulate.  The sentences were stacked on a leading
    # axis in the wrapper, so this reshape is a layout-free leading-dim merge
    # (no in-kernel concatenate / extra VMEM copy).
    xm = x_ref[...].reshape(2 * TB * TS, D)
    h = jnp.dot(xm, w_ref[...], preferred_element_type=jnp.float32)
    h = jnp.tanh(h + b_ref[...])                       # f32; bias broadcast once
    h = h.reshape(2 * TB, TS, H)

    # ---- _pool(pooler='mean'), first (buggy) branch of the reference module:
    # drop GLOBAL tokens 0 and s_total-1 ([CLS]/[SEP]) then MAX over sequence.
    # Rank-1 (1, TS, 1) mask; padded sequence positions (>= s_total-1) are
    # dropped automatically.
    pos = lax.broadcasted_iota(jnp.int32, (1, TS, 1), 1) + k * TS
    keep = (pos > 0) & (pos < s_total - 1)
    tile_max = jnp.max(jnp.where(keep, h, -jnp.inf), axis=1)    # (2*TB, H)
    acc_ref[...] = jnp.maximum(acc_ref[...], tile_max)

    # ---- Finalize: F.cosine_similarity(p1, p2, dim=1, eps=1e-8)
    # denom = max(||p1||*||p2||, eps) == sqrt(max(||p1||^2*||p2||^2, eps^2))
    @pl.when(k == pl.num_programs(1) - 1)
    def _():
        p = acc_ref[...]
        p1 = p[:TB]                                             # sentence 1
        p2 = p[TB:]                                             # sentence 2
        num = jnp.sum(p1 * p2, axis=1)
        n1sq = jnp.sum(p1 * p1, axis=1)
        n2sq = jnp.sum(p2 * p2, axis=1)
        eps = jnp.float32(1e-8)
        cos = num * lax.rsqrt(jnp.maximum(n1sq * n2sq, eps * eps))
        o_ref[...] = cos[None, None, :]                         # (1, 1, TB)


def sbert_pallas(x1_emb, x2_emb, w, b, *, tb=128, ts=256):
    """Grid over (batch tiles, sequence tiles); W/b stay VMEM resident."""
    B, S, D = x1_emb.shape
    H = w.shape[1]
    assert S >= 3, "pooling window [1, S-2] must be non-empty"

    # bf16 MXU operands (halves DMA + VMEM, native on v6e/v7x MXU); all
    # VPU/EUP work (tanh / max / rsqrt) stays f32 (safe on v5e too).
    x = jnp.stack([x1_emb.astype(jnp.bfloat16),
                   x2_emb.astype(jnp.bfloat16)], axis=0)        # (2, B, S, D)
    w = w.astype(jnp.bfloat16)
    b = b.astype(jnp.float32).reshape(1, H)

    # Batch tile: up to 128 for a lane-dense output store; at production B
    # this also makes nb >= 2 so the "parallel" axis shards across v7x's TCs.
    tb = max(1, min(tb, B))
    nb = pl.cdiv(B, tb)
    Bp = nb * tb
    # Sequence tile: bounds VMEM independent of S (running max across tiles).
    ts = S if S <= ts else ts
    ns = pl.cdiv(S, ts)
    Sp = ns * ts
    if (Bp, Sp) != (B, S):
        # Padded seq positions land at global index >= S-1 and are masked out
        # in the kernel; padded batch rows are sliced off below.
        x = jnp.pad(x, ((0, 0), (0, Bp - B), (0, Sp - S), (0, 0)))

    # Explicit VMEM budget: double-buffered x tile + resident W/b + f32 h
    # intermediate + running-max scratch, with 2x headroom, clamped to ~3/4 of
    # this generation's physical VMEM (~48 MiB v7x, ~96 MiB v5e/v6e).
    est = (
        2 * (2 * tb * ts * D) * 2             # x tile, double buffered, bf16
        + (D * H) * 2 + H * 4                 # resident W (bf16) + b (f32)
        + 2 * (2 * tb * ts) * max(D, H) * 4   # xm relayout + h intermediate, f32
        + (2 * tb * H) * 4                    # running-max scratch
        + 2 * tb * 4                          # output tile
    )
    try:
        vmem_cap = pltpu.get_tpu_info().vmem_capacity_bytes
    except Exception:
        vmem_cap = 64 * 1024 * 1024
    vmem_limit = int(min(max(2 * est, 32 * 1024 * 1024), (3 * vmem_cap) // 4))

    def build(single_buffer_weights):
        def resident(shape):
            index_map = lambda i, k: (0,) * len(shape)
            if single_buffer_weights:
                # Constant block index -> a single buffer is enough.
                return pl.BlockSpec(shape, index_map,
                                    pipeline_mode=pl.Buffered(1))
            return pl.BlockSpec(shape, index_map)

        return pl.pallas_call(
            functools.partial(sbert_kernel, s_total=S),
            grid=(nb, ns),
            out_shape=jax.ShapeDtypeStruct((nb, 1, tb), jnp.float32),
            in_specs=[
                pl.BlockSpec((2, tb, ts, D), lambda i, k: (0, i, k, 0)),
                resident((D, H)),          # W (resident)
                resident((1, H)),          # bias (resident)
            ],
            out_specs=pl.BlockSpec((1, 1, tb), lambda i, k: (i, 0, 0)),
            scratch_shapes=[pltpu.VMEM((2 * tb, H), jnp.float32)],
            compiler_params=pltpu.CompilerParams(
                dimension_semantics=("parallel", "arbitrary"),
                vmem_limit_bytes=vmem_limit,
            ),
        )

    try:
        out = build(True)(x, w, b)
    except Exception:
        # Fallback if pipeline_mode=pl.Buffered(1) is unsupported on this build.
        out = build(False)(x, w, b)

    return out.reshape(-1)[:B]                                   # (B,)


def embed_tokens(tokens, tok_emb, seg_emb, pos_emb):
    """Plain-JAX glue: embedding lookups (gather); seg_ids are all zeros,
    exactly as in the PyTorch forward (torch.zeros_like(sent))."""
    B, S = tokens.shape
    seg_ids = jnp.zeros_like(tokens)
    x = tok_emb[tokens] + seg_emb[seg_ids] + pos_emb[None, :S, :]
    return x.astype(jnp.float32)


def sentence_bert_for_reg(sent1, sent2, params):
    # TODO(synk): the real `embedder` is a full transformer encoder; a single
    # dense tanh layer stands in here (pooling / cosine semantics are exact).
    x1 = embed_tokens(sent1, params['tok_emb'], params['seg_emb'], params['pos_emb'])
    x2 = embed_tokens(sent2, params['tok_emb'], params['seg_emb'], params['pos_emb'])
    return sbert_pallas(x1, x2, params['w'], params['b'])


def _reference(sent1, sent2, params):
    """Pure-jnp reference (same bf16-operand / f32-accumulate matmul numerics)."""
    x1 = embed_tokens(sent1, params['tok_emb'], params['seg_emb'], params['pos_emb'])
    x2 = embed_tokens(sent2, params['tok_emb'], params['seg_emb'], params['pos_emb'])
    w = params['w'].astype(jnp.bfloat16)

    def enc(x):
        h = jnp.einsum('bsd,dh->bsh', x.astype(jnp.bfloat16), w,
                       preferred_element_type=jnp.float32)
        return jnp.tanh(h + params['b'][None])

    h1, h2 = enc(x1), enc(x2)
    p1 = jnp.max(h1[:, 1:-1, :], axis=1)
    p2 = jnp.max(h2[:, 1:-1, :], axis=1)
    num = jnp.sum(p1 * p2, axis=1)
    den = jnp.maximum(jnp.linalg.norm(p1, axis=1) * jnp.linalg.norm(p2, axis=1), 1e-8)
    return num / den


if __name__ == "__main__":
    # Small shapes consistent with the module: two token-id sentences.
    B, S, D, H, V = 2, 8, 32, 32, 50

    key = jax.random.PRNGKey(0)
    k_tok, k_seg, k_pos, k_w, k_b, k_s1, k_s2 = jax.random.split(key, 7)

    params = {
        'tok_emb': jax.random.normal(k_tok, (V, D), jnp.float32) * 0.1,
        'seg_emb': jax.random.normal(k_seg, (2, D), jnp.float32) * 0.1,
        'pos_emb': jax.random.normal(k_pos, (S, D), jnp.float32) * 0.1,
        'w': jax.random.normal(k_w, (D, H), jnp.float32) * (1.0 / jnp.sqrt(D)),
        'b': jax.random.normal(k_b, (1, H), jnp.float32) * 0.1,
    }

    sent1 = jax.random.randint(k_s1, (B, S), 0, V, dtype=jnp.int32)
    sent2 = jax.random.randint(k_s2, (B, S), 0, V, dtype=jnp.int32)

    out = sentence_bert_for_reg(sent1, sent2, params)
    out = jax.block_until_ready(out)

    ref = jax.block_until_ready(_reference(sent1, sent2, params))
    assert out.shape == (B,)
    assert jnp.allclose(out, ref, atol=5e-4, rtol=5e-4), (out, ref)

    print("KERNEL_OK")
</pallas_src>

<mosaic_0001>
module attributes {stable_mosaic.version = 11 : i64} {
  func.func @sbert_kernel(%arg0: i32, %arg1: i32, %arg2: memref<2x2x8x32xbf16, #tpu.memory_space<vmem>>, %arg3: memref<32x32xbf16, #tpu.memory_space<vmem>>, %arg4: memref<1x32xf32, #tpu.memory_space<vmem>>, %arg5: memref<1x1x2xf32, #tpu.memory_space<vmem>>, %arg6: memref<4x32xf32, #tpu.memory_space<vmem>>) attributes {dimension_semantics = [#tpu.dimension_semantics<parallel>, #tpu.dimension_semantics<arbitrary>], iteration_bounds = array<i64: 1, 1>, scalar_prefetch = 0 : i64, scratch_operands = 1 : i64, tpu.core_type = #tpu.core_type<tc>, window_params = [{transform_indices = @transform_0, window_bounds = array<i64: 2, 2, 8, 32>}, {pipeline_mode = #tpu.pipeline_mode<synchronous>, transform_indices = @transform_1, window_bounds = array<i64: 32, 32>}, {pipeline_mode = #tpu.pipeline_mode<synchronous>, transform_indices = @transform_2, window_bounds = array<i64: 1, 32>}, {transform_indices = @transform_3, window_bounds = array<i64: 1, 1, 2>}]} {
    %c0_i32 = arith.constant 0 : i32
    %0 = arith.cmpi eq, %arg1, %c0_i32 : i32
    %1 = arith.extui %0 : i1 to i32
    %c0_i32_0 = arith.constant 0 : i32
    %2 = arith.cmpi ne, %1, %c0_i32_0 : i32
    scf.if %2 {
      %cst_17 = arith.constant 0xFF800000 : f32
      %32 = vector.broadcast %cst_17 : f32 to vector<4x32xf32>
      %c0_18 = arith.constant 0 : index
      %c0_19 = arith.constant 0 : index
      %33 = vector.load %arg6[%c0_18, %c0_19] : memref<4x32xf32, #tpu.memory_space<vmem>>, vector<4x32xf32>
      tpu.vector_store %arg6[%c0_18, %c0_19], %32 {strides = array<i32>} : memref<4x32xf32, #tpu.memory_space<vmem>>, vector<4x32xf32>,
    } else {
    }
    %c0 = arith.constant 0 : index
    %c0_1 = arith.constant 0 : index
    %c0_2 = arith.constant 0 : index
    %c0_3 = arith.constant 0 : index
    %3 = vector.load %arg2[%c0, %c0_1, %c0_2, %c0_3] : memref<2x2x8x32xbf16, #tpu.memory_space<vmem>>, vector<2x2x8x32xbf16>
    %4 = vector.shape_cast %3 : vector<2x2x8x32xbf16> to vector<32x32xbf16>
    %c0_4 = arith.constant 0 : index
    %c0_5 = arith.constant 0 : index
    %5 = vector.load %arg3[%c0_4, %c0_5] : memref<32x32xbf16, #tpu.memory_space<vmem>>, vector<32x32xbf16>
    %cst = arith.constant dense<0.000000e+00> : vector<32x32xf32>
    %6 = tpu.matmul %4, %5, %cst {dimension_numbers = #tpu.dot_dimension_numbers<[1], [0], [0], [1], [0, 0, 1, 1], [], []>} : vector<32x32xbf16>, vector<32x32xbf16>, vector<32x32xf32> -> vector<32x32xf32>
    %c0_6 = arith.constant 0 : index
    %c0_7 = arith.constant 0 : index
    %7 = vector.load %arg4[%c0_6, %c0_7] : memref<1x32xf32, #tpu.memory_space<vmem>>, vector<1x32xf32>
    %8 = vector.broadcast %7 : vector<1x32xf32> to vector<32x32xf32>
    %9 = arith.addf %6, %8 : vector<32x32xf32>
    %10 = math.tanh %9 : vector<32x32xf32>
    %11 = vector.shape_cast %10 : vector<32x32xf32> to vector<4x8x32xf32>
    %12 = tpu.iota {dimensions = array<i32: 1>} : vector<1x8x1xi32>
    %c8_i32 = arith.constant 8 : i32
    %13 = arith.muli %arg1, %c8_i32 : i32
    %14 = vector.broadcast %13 : i32 to vector<1x8x1xi32>
    %15 = arith.addi %12, %14 : vector<1x8x1xi32>
    %c0_i32_8 = arith.constant 0 : i32
    %16 = vector.broadcast %c0_i32_8 : i32 to vector<1x8x1xi32>
    %17 = arith.cmpi sgt, %15, %16 : vector<1x8x1xi32>
    %c7_i32 = arith.constant 7 : i32
    %18 = vector.broadcast %c7_i32 : i32 to vector<1x8x1xi32>
    %19 = arith.cmpi slt, %15, %18 : vector<1x8x1xi32>
    %20 = arith.andi %17, %19 : vector<1x8x1xi1>
    %cst_9 = arith.constant 0xFF800000 : f32
    %21 = vector.shape_cast %20 : vector<1x8x1xi1> to vector<1x8x1xi1>
    %22 = vector.broadcast %21 : vector<1x8x1xi1> to vector<4x8x32xi1>
    %23 = vector.broadcast %cst_9 : f32 to vector<4x8x32xf32>
    %24 = arith.select %22, %11, %23 : vector<4x8x32xi1>, vector<4x8x32xf32>
    %cst_10 = arith.constant dense<0xFF800000> : vector<4x32xf32>
    %25 = vector.multi_reduction <maximumf>, %24, %cst_10 [1] : vector<4x8x32xf32> to vector<4x32xf32>
    %c0_11 = arith.constant 0 : index
    %c0_12 = arith.constant 0 : index
    %26 = vector.load %arg6[%c0_11, %c0_12] : memref<4x32xf32, #tpu.memory_space<vmem>>, vector<4x32xf32>
    %27 = arith.maximumf %26, %25 : vector<4x32xf32>
    %c0_13 = arith.constant 0 : index
    %c0_14 = arith.constant 0 : index
    %28 = vector.load %arg6[%c0_13, %c0_14] : memref<4x32xf32, #tpu.memory_space<vmem>>, vector<4x32xf32>
    tpu.vector_store %arg6[%c0_13, %c0_14], %27 {strides = array<i32>} : memref<4x32xf32, #tpu.memory_space<vmem>>, vector<4x32xf32>,
    %c0_i32_15 = arith.constant 0 : i32
    %29 = arith.cmpi eq, %arg1, %c0_i32_15 : i32
    %30 = arith.extui %29 : i1 to i32
    %c0_i32_16 = arith.constant 0 : i32
    %31 = arith.cmpi ne, %30, %c0_i32_16 : i32
    scf.if %31 {
      %c0_17 = arith.constant 0 : index
      %c0_18 = arith.constant 0 : index
      %32 = vector.load %arg6[%c0_17, %c0_18] : memref<4x32xf32, #tpu.memory_space<vmem>>, vector<4x32xf32>
      %33 = vector.extract_strided_slice %32 {offsets = [0, 0], sizes = [2, 32], strides = [1, 1]} : vector<4x32xf32> to vector<2x32xf32>
      %34 = vector.extract_strided_slice %32 {offsets = [2, 0], sizes = [2, 32], strides = [1, 1]} : vector<4x32xf32> to vector<2x32xf32>
      %35 = arith.mulf %33, %34 : vector<2x32xf32>
      %cst_19 = arith.constant dense<0.000000e+00> : vector<2xf32>
      %36 = vector.multi_reduction <add>, %35, %cst_19 [1] : vector<2x32xf32> to vector<2xf32>
      %37 = arith.mulf %33, %33 : vector<2x32xf32>
      %cst_20 = arith.constant dense<0.000000e+00> : vector<2xf32>
      %38 = vector.multi_reduction <add>, %37, %cst_20 [1] : vector<2x32xf32> to vector<2xf32>
      %39 = arith.mulf %34, %34 : vector<2x32xf32>
      %cst_21 = arith.constant dense<0.000000e+00> : vector<2xf32>
      %40 = vector.multi_reduction <add>, %39, %cst_21 [1] : vector<2x32xf32> to vector<2xf32>
      %41 = arith.mulf %38, %40 : vector<2xf32>
      %cst_22 = arith.constant 9.99999993E-9 : f32
      %cst_23 = arith.constant 9.99999993E-9 : f32
      %42 = arith.mulf %cst_22, %cst_23 : f32
      %43 = vector.broadcast %42 : f32 to vector<2xf32>
      %44 = arith.maximumf %41, %43 : vector<2xf32>
      %45 = math.rsqrt %44 : vector<2xf32>
      %46 = arith.mulf %36, %45 : vector<2xf32>
      %47 = vector.shape_cast %46 : vector<2xf32> to vector<1x1x2xf32>
      %c0_24 = arith.constant 0 : index
      %c0_25 = arith.constant 0 : index
      %c0_26 = arith.constant 0 : index
      %48 = vector.load %arg5[%c0_24, %c0_25, %c0_26] : memref<1x1x2xf32, #tpu.memory_space<vmem>>, vector<1x1x2xf32>
      tpu.vector_store %arg5[%c0_24, %c0_25, %c0_26], %47 {strides = array<i32>} : memref<1x1x2xf32, #tpu.memory_space<vmem>>, vector<1x1x2xf32>,
    } else {
    }
    return
  }
  func.func @transform_0(%arg0: i32, %arg1: i32) -> (i32, i32, i32, i32) {
    %c0_i32 = arith.constant 0 : i32
    %c0_i32_0 = arith.constant 0 : i32
    %c0_i32_1 = arith.constant 0 : i32
    return %c0_i32, %arg0, %arg1, %c0_i32_0 : i32, i32, i32, i32
  }
  func.func @transform_1(%arg0: i32, %arg1: i32) -> (i32, i32) {
    %c0_i32 = arith.constant 0 : i32
    %c0_i32_0 = arith.constant 0 : i32
    %c0_i32_1 = arith.constant 0 : i32
    return %c0_i32, %c0_i32_0 : i32, i32
  }
  func.func @transform_2(%arg0: i32, %arg1: i32) -> (i32, i32) {
    %c0_i32 = arith.constant 0 : i32
    %c0_i32_0 = arith.constant 0 : i32
    %c0_i32_1 = arith.constant 0 : i32
    return %c0_i32, %c0_i32_0 : i32, i32
  }
  func.func @transform_3(%arg0: i32, %arg1: i32) -> (i32, i32, i32) {
    %c0_i32 = arith.constant 0 : i32
    %c0_i32_0 = arith.constant 0 : i32
    %c0_i32_1 = arith.constant 0 : i32
    return %arg0, %c0_i32, %c0_i32_0 : i32, i32, i32
  }
}

module attributes {stable_mosaic.version = 11 : i64} {
  func.func @sbert_kernel(%arg0: i32, %arg1: i32, %arg2: memref<2x2x8x32xbf16, #tpu.memory_space<vmem>>, %arg3: memref<32x32xbf16, #tpu.memory_space<vmem>>, %arg4: memref<1x32xf32, #tpu.memory_space<vmem>>, %arg5: memref<1x1x2xf32, #tpu.memory_space<vmem>>, %arg6: memref<4x32xf32, #tpu.memory_space<vmem>>) attributes {dimension_semantics = [#tpu.dimension_semantics<parallel>, #tpu.dimension_semantics<arbitrary>], iteration_bounds = array<i64: 1, 1>, scalar_prefetch = 0 : i64, scratch_operands = 1 : i64, tpu.core_type = #tpu.core_type<tc>, window_params = [{transform_indices = @transform_0, window_bounds = array<i64: 2, 2, 8, 32>}, {pipeline_mode = #tpu.pipeline_mode<synchronous>, transform_indices = @transform_1, window_bounds = array<i64: 32, 32>}, {pipeline_mode = #tpu.pipeline_mode<synchronous>, transform_indices = @transform_2, window_bounds = array<i64: 1, 32>}, {transform_indices = @transform_3, window_bounds = array<i64: 1, 1, 2>}]} {
    %c0_i32 = arith.constant 0 : i32
    %0 = arith.cmpi eq, %arg1, %c0_i32 : i32
    %1 = arith.extui %0 : i1 to i32
    %c0_i32_0 = arith.constant 0 : i32
    %2 = arith.cmpi ne, %1, %c0_i32_0 : i32
    scf.if %2 {
      %cst_17 = arith.constant 0xFF800000 : f32
      %32 = vector.broadcast %cst_17 : f32 to vector<4x32xf32>
      %c0_18 = arith.constant 0 : index
      %c0_19 = arith.constant 0 : index
      %33 = vector.load %arg6[%c0_18, %c0_19] : memref<4x32xf32, #tpu.memory_space<vmem>>, vector<4x32xf32>
      tpu.vector_store %arg6[%c0_18, %c0_19], %32 {strides = array<i32>} : memref<4x32xf32, #tpu.memory_space<vmem>>, vector<4x32xf32>,
    } else {
    }
    %c0 = arith.constant 0 : index
    %c0_1 = arith.constant 0 : index
    %c0_2 = arith.constant 0 : index
    %c0_3 = arith.constant 0 : index
    %3 = vector.load %arg2[%c0, %c0_1, %c0_2, %c0_3] : memref<2x2x8x32xbf16, #tpu.memory_space<vmem>>, vector<2x2x8x32xbf16>
    %4 = vector.shape_cast %3 : vector<2x2x8x32xbf16> to vector<32x32xbf16>
    %c0_4 = arith.constant 0 : index
    %c0_5 = arith.constant 0 : index
    %5 = vector.load %arg3[%c0_4, %c0_5] : memref<32x32xbf16, #tpu.memory_space<vmem>>, vector<32x32xbf16>
    %cst = arith.constant dense<0.000000e+00> : vector<32x32xf32>
    %6 = tpu.matmul %4, %5, %cst {dimension_numbers = #tpu.dot_dimension_numbers<[1], [0], [0], [1], [0, 0, 1, 1], [], []>} : vector<32x32xbf16>, vector<32x32xbf16>, vector<32x32xf32> -> vector<32x32xf32>
    %c0_6 = arith.constant 0 : index
    %c0_7 = arith.constant 0 : index
    %7 = vector.load %arg4[%c0_6, %c0_7] : memref<1x32xf32, #tpu.memory_space<vmem>>, vector<1x32xf32>
    %8 = vector.broadcast %7 : vector<1x32xf32> to vector<32x32xf32>
    %9 = arith.addf %6, %8 : vector<32x32xf32>
    %10 = math.tanh %9 : vector<32x32xf32>
    %11 = vector.shape_cast %10 : vector<32x32xf32> to vector<4x8x32xf32>
    %12 = tpu.iota {dimensions = array<i32: 1>} : vector<1x8x1xi32>
    %c8_i32 = arith.constant 8 : i32
    %13 = arith.muli %arg1, %c8_i32 : i32
    %14 = vector.broadcast %13 : i32 to vector<1x8x1xi32>
    %15 = arith.addi %12, %14 : vector<1x8x1xi32>
    %c0_i32_8 = arith.constant 0 : i32
    %16 = vector.broadcast %c0_i32_8 : i32 to vector<1x8x1xi32>
    %17 = arith.cmpi sgt, %15, %16 : vector<1x8x1xi32>
    %c7_i32 = arith.constant 7 : i32
    %18 = vector.broadcast %c7_i32 : i32 to vector<1x8x1xi32>
    %19 = arith.cmpi slt, %15, %18 : vector<1x8x1xi32>
    %20 = arith.andi %17, %19 : vector<1x8x1xi1>
    %cst_9 = arith.constant 0xFF800000 : f32
    %21 = vector.shape_cast %20 : vector<1x8x1xi1> to vector<1x8x1xi1>
    %22 = vector.broadcast %21 : vector<1x8x1xi1> to vector<4x8x32xi1>
    %23 = vector.broadcast %cst_9 : f32 to vector<4x8x32xf32>
    %24 = arith.select %22, %11, %23 : vector<4x8x32xi1>, vector<4x8x32xf32>
    %cst_10 = arith.constant dense<0xFF800000> : vector<4x32xf32>
    %25 = vector.multi_reduction <maximumf>, %24, %cst_10 [1] : vector<4x8x32xf32> to vector<4x32xf32>
    %c0_11 = arith.constant 0 : index
    %c0_12 = arith.constant 0 : index
    %26 = vector.load %arg6[%c0_11, %c0_12] : memref<4x32xf32, #tpu.memory_space<vmem>>, vector<4x32xf32>
    %27 = arith.maximumf %26, %25 : vector<4x32xf32>
    %c0_13 = arith.constant 0 : index
    %c0_14 = arith.constant 0 : index
    %28 = vector.load %arg6[%c0_13, %c0_14] : memref<4x32xf32, #tpu.memory_space<vmem>>, vector<4x32xf32>
    tpu.vector_store %arg6[%c0_13, %c0_14], %27 {strides = array<i32>} : memref<4x32xf32, #tpu.memory_space<vmem>>, vector<4x32xf32>,
    %c0_i32_15 = arith.constant 0 : i32
    %29 = arith.cmpi eq, %arg1, %c0_i32_15 : i32
    %30 = arith.extui %29 : i1 to i32
    %c0_i32_16 = arith.constant 0 : i32
    %31 = arith.cmpi ne, %30, %c0_i32_16 : i32
    scf.if %31 {
      %c0_17 = arith.constant 0 : index
      %c0_18 = arith.constant 0 : index
      %32 = vector.load %arg6[%c0_17, %c0_18] : memref<4x32xf32, #tpu.memory_space<vmem>>, vector<4x32xf32>
      %33 = vector.extract_strided_slice %32 {offsets = [0, 0], sizes = [2, 32], strides = [1, 1]} : vector<4x32xf32> to vector<2x32xf32>
      %34 = vector.extract_strided_slice %32 {offsets = [2, 0], sizes = [2, 32], strides = [1, 1]} : vector<4x32xf32> to vector<2x32xf32>
      %35 = arith.mulf %33, %34 : vector<2x32xf32>
      %cst_19 = arith.constant dense<0.000000e+00> : vector<2xf32>
      %36 = vector.multi_reduction <add>, %35, %cst_19 [1] : vector<2x32xf32> to vector<2xf32>
      %37 = arith.mulf %33, %33 : vector<2x32xf32>
      %cst_20 = arith.constant dense<0.000000e+00> : vector<2xf32>
      %38 = vector.multi_reduction <add>, %37, %cst_20 [1] : vector<2x32xf32> to vector<2xf32>
      %39 = arith.mulf %34, %34 : vector<2x32xf32>
      %cst_21 = arith.constant dense<0.000000e+00> : vector<2xf32>
      %40 = vector.multi_reduction <add>, %39, %cst_21 [1] : vector<2x32xf32> to vector<2xf32>
      %41 = arith.mulf %38, %40 : vector<2xf32>
      %cst_22 = arith.constant 9.99999993E-9 : f32
      %cst_23 = arith.constant 9.99999993E-9 : f32
      %42 = arith.mulf %cst_22, %cst_23 : f32
      %43 = vector.broadcast %42 : f32 to vector<2xf32>
      %44 = arith.maximumf %41, %43 : vector<2xf32>
      %45 = math.rsqrt %44 : vector<2xf32>
      %46 = arith.mulf %36, %45 : vector<2xf32>
      %47 = vector.shape_cast %46 : vector<2xf32> to vector<1x1x2xf32>
      %c0_24 = arith.constant 0 : index
      %c0_25 = arith.constant 0 : index
      %c0_26 = arith.constant 0 : index
      %48 = vector.load %arg5[%c0_24, %c0_25, %c0_26] : memref<1x1x2xf32, #tpu.memory_space<vmem>>, vector<1x1x2xf32>
      tpu.vector_store %arg5[%c0_24, %c0_25, %c0_26], %47 {strides = array<i32>} : memref<1x1x2xf32, #tpu.memory_space<vmem>>, vector<1x1x2xf32>,
    } else {
    }
    return
  }
  func.func @transform_0(%arg0: i32, %arg1: i32) -> (i32, i32, i32, i32) {
    %c0_i32 = arith.constant 0 : i32
    %c0_i32_0 = arith.constant 0 : i32
    %c0_i32_1 = arith.constant 0 : i32
    return %c0_i32, %arg0, %arg1, %c0_i32_0 : i32, i32, i32, i32
  }
  func.func @transform_1(%arg0: i32, %arg1: i32) -> (i32, i32) {
    %c0_i32 = arith.constant 0 : i32
    %c0_i32_0 = arith.constant 0 : i32
    %c0_i32_1 = arith.constant 0 : i32
    return %c0_i32, %c0_i32_0 : i32, i32
  }
  func.func @transform_2(%arg0: i32, %arg1: i32) -> (i32, i32) {
    %c0_i32 = arith.constant 0 : i32
    %c0_i32_0 = arith.constant 0 : i32
    %c0_i32_1 = arith.constant 0 : i32
    return %c0_i32, %c0_i32_0 : i32, i32
  }
  func.func @transform_3(%arg0: i32, %arg1: i32) -> (i32, i32, i32) {
    %c0_i32 = arith.constant 0 : i32
    %c0_i32_0 = arith.constant 0 : i32
    %c0_i32_1 = arith.constant 0 : i32
    return %arg0, %c0_i32, %c0_i32_0 : i32, i32, i32
  }
}

</mosaic_0001>

<llo_original>
// kernel: tpu_custom_call.1
$region0: #{tpu_custom_call.1}
  #allocation0 [shape = 'u32[]', space=smem, size = 0x4, offset = 0x4, fixed_abs, tag = 'smem constant byte address 0x4 - core index']
  #allocation1 [shape = 'u32[144,128]{1,0:T(1,128)}', space=vmem, size = 0x12000, scoped, tag = 'internal scratch']
  #allocation2 [shape = 'f32[4,32]{1,0:T(4,128)}', space=vmem, size = 0x800, scoped, tag = 'scratch operand']
  %s0 = inlined_call_operand.hbm [shape: bf16[2,2,8,32], index: 0, kind: input, shape index: {}]
  %s1 = inlined_call_operand.hbm [shape: bf16[32,32], index: 1, kind: input, shape index: {}]
  %s2 = inlined_call_operand.vmem [shape: f32[1,32], index: 2, kind: input, shape index: {}]
  %s3 = inlined_call_operand.hbm [shape: f32[1,1,2], index: 3, kind: output, shape index: {}]
  %s4 = sld [smem:[#allocation0]]
  $region38: #{tpu_custom_call.1} parent=0
    _
  %s6 = ssub.s32 1, %s4
  %s7 = scalar_select 0, %s6, %s4
  $region1: #{tpu_custom_call.1} parent=0
    #allocation3 [shape = 'u8[8192]{0}', space=vmem, size = 0x2000, scoped, tag = 'input window, operand 0, single buffered']
    #allocation4 [shape = 's32[1]{0}', space=sflag, size = 0x4, scoped, tag = 'scoped memory for tpu_custom_call.1']
    #allocation5 [shape = 's32[1]{0}', space=sflag, size = 0x4, scoped, tag = 'scoped memory for tpu_custom_call.1']
    #allocation6 [shape = 'u8[8192]{0}', space=vmem, size = 0x2000, scoped, tag = 'input window, operand 1, single buffered']
    #allocation7 [shape = 's32[1]{0}', space=sflag, size = 0x4, scoped, tag = 'scoped memory for tpu_custom_call.1']
    #allocation8 [shape = 'u8[512]{0}', space=vmem, size = 0x400, scoped, tag = 'output window, operand 0, single buffered']
    %8 = vsyncpa [#allocation4], 0
    %9 = vsyncpa [#allocation7], 0
    %10 = vsyncpa [#allocation5], 0
    // Predicated region
    $region2: #{tpu_custom_call.1} parent=1 // pred_check
      _
    $region3: #{tpu_custom_call.1} parent=1 // pred_check_branch
      %12 = sbr.rel (0) target = $region5
    $region4: #{tpu_custom_call.1} parent=1 // pred_region
      %s14 = ssub.s32 256, 256
      %15 = vsyncadd [#allocation4], %s14
      %s16 = sshll.u32 [#allocation3], 4
      %s17 = int_to_ptr.vmem [resolvable:$true] %s16
      %22 = dma.hbm_to_vmem [thread:$0]  %s0, 256, %s17, [#allocation4], 64, 64, 4
    $region5: #{tpu_custom_call.1} parent=1 // pred_fallthru
      _
    // Predicated region
    $region6: #{tpu_custom_call.1} parent=1 // pred_check
      _
    $region7: #{tpu_custom_call.1} parent=1 // pred_check_branch
      %24 = sbr.rel (0) target = $region9
    $region8: #{tpu_custom_call.1} parent=1 // pred_region
      %s26 = ssub.s32 256, 256
      %27 = vsyncadd [#allocation7], %s26
      %s28 = sshll.u32 [#allocation6], 4
      %s29 = int_to_ptr.vmem [resolvable:$true] %s28
      %34 = dma.hbm_to_vmem [thread:$0]  %s1, 256, %s29, [#allocation7], 64, 64, 4
    $region9: #{tpu_custom_call.1} parent=1 // pred_fallthru
      _
    // Predicated region
    $region10: #{tpu_custom_call.1} parent=1 // pred_check
      _
    $region11: #{tpu_custom_call.1} parent=1 // pred_check_branch
      %36 = sbr.rel (0) target = $region13
    $region12: #{tpu_custom_call.1} parent=1 // pred_region
      _
    $region13: #{tpu_custom_call.1} parent=1 // pred_fallthru
      _
    // Predicated region
    $region14: #{tpu_custom_call.1} parent=1 // pred_check
      _
    $region15: #{tpu_custom_call.1} parent=1 // pred_check_branch
      %38 = sbr.rel (0) target = $region17
    $region16: #{tpu_custom_call.1} parent=1 // pred_region
      %39 = dma.done [#allocation4], 256
    $region17: #{tpu_custom_call.1} parent=1 // pred_fallthru
      _
    // Predicated region
    $region18: #{tpu_custom_call.1} parent=1 // pred_check
      _
    $region19: #{tpu_custom_call.1} parent=1 // pred_check_branch
      %41 = sbr.rel (0) target = $region21
    $region20: #{tpu_custom_call.1} parent=1 // pred_region
      %42 = dma.done [#allocation7], 256
    $region21: #{tpu_custom_call.1} parent=1 // pred_fallthru
      _
    %p44 = scmp.eq.s32.totalorder 0, 0
    // Predicated region
    $region22: #{tpu_custom_call.1} parent=1 // pred_check
      %p45 = pneg %p44
    $region23: #{tpu_custom_call.1} parent=1 // pred_check_branch
      %47 = sbr.rel (%p45) target = $region25
    $region24: #{tpu_custom_call.1} parent=1 // pred_region
      %vm48 = vcmask 257024
      %49 = vst.msk [vmem:[#allocation2] sm:$0xf] %vm48, -inf
    $region25: #{tpu_custom_call.1} parent=1 // pred_fallthru
      _
    %v50 = vld [vmem:[#allocation3] sm:$0xf]
    %v51 = vld [vmem:[#allocation3 + $0x4] sm:$0xf]
    %v52 = vld [vmem:[#allocation3 + $0x8] sm:$0xf]
    %v53 = vld [vmem:[#allocation3 + $0xc] sm:$0xf]
    %v54 = vld [vmem:[#allocation6] sm:$0xf]
    %v55 = vld [vmem:[#allocation6 + $0x4] sm:$0xf]
    %v56 = vld [vmem:[#allocation6 + $0x8] sm:$0xf]
    %v57 = vld [vmem:[#allocation6 + $0xc] sm:$0xf]
    %v58 = vld [vmem:[%s2] sm:$0x1]
    %v60 = vlaneseq
    %v61 = vshrl.u32 %v60, 7
    %v62 = vsub.s32 0, %v61
    %v63 = vrot.slane %v58, %v62
    %v69 = vunpack.c.l.b16 %v50
    %v70 = vunpack.c.l.b16 %v51
    %v71 = vunpack.c.l.b16 %v52
    %v72 = vunpack.c.l.b16 %v53
    %v73 = vpack.c.b16 %v70, %v69
    %v74 = vpack.c.b16 %v72, %v71
    %v79 = vunpack.c.l.b16 %v54
    %v80 = vunpack.c.l.b16 %v55
    %v81 = vunpack.c.l.b16 %v56
    %v82 = vunpack.c.l.b16 %v57
    %v83 = vpack.c.b16 %v80, %v79
    %v84 = vpack.c.b16 %v82, %v81
    %vm87 = vcmask 261120
    %v89 = vsel %vm87, %v73, 0
    %v92 = vsel %vm87, %v74, 0
    %94 = vmatprep.subr.bf16.mxu0 0
    %95 = vmatpush1.bf16.msra.mxu0 0
    %96 = vmatprep.subr.bf16.mxu0 0
    %97 = vmatpush1.bf16.msra.mxu0 0
    %98 = vmatprep.subr.bf16.mxu0 0
    %99 = vmatpush1.bf16.msra.mxu0 0
    %100 = vmatprep.subr.bf16.mxu0 0
    %101 = vmatpush1.bf16.msra.mxu0 0
    %102 = vmatprep.subr.bf16.mxu0 0
    %103 = vmatpush1.bf16.msra.mxu0 0
    %104 = vmatprep.subr.bf16.mxu0 0
    %105 = vmatpush1.bf16.msra.mxu0 0
    %106 = vmatprep.subr.bf16.mxu0 0
    %107 = vmatpush1.bf16.msra.mxu0 %v84
    %108 = vmatprep.subr.bf16.mxu0 0
    %109 = vmatpush1.bf16.msra.mxu0 %v83
    %110 = vmatprep.subr.bf16.mxu0 0
    %111 = vmatpush2.bf16.msra.mxu0 0
    %112 = vmatprep.subr.bf16.mxu0 0
    %113 = vmatpush2.bf16.msra.mxu0 0
    %114 = vmatprep.subr.bf16.mxu0 0
    %115 = vmatpush2.bf16.msra.mxu0 0
    %116 = vmatprep.subr.bf16.mxu0 0
    %117 = vmatpush2.bf16.msra.mxu0 0
    %118 = vmatprep.subr.bf16.mxu0 0
    %119 = vmatpush2.bf16.msra.mxu0 0
    %120 = vmatprep.subr.bf16.mxu0 0
    %121 = vmatpush2.bf16.msra.mxu0 0
    %122 = vmatprep.subr.bf16.mxu0 0
    %123 = vmatpush2.bf16.msra.mxu0 0
    %124 = vmatprep.subr.bf16.mxu0 0
    %125 = vmatpush2.bf16.msra.mxu0 0
    %126 = vmatprep.mubr.bf16.mxu0 0
    %127 = vmatmul.mubr.bf16.gmra.mxu0 %v89
    %v128 = vpop.f32.mrf.mxu0
    %v129 = vadd.f32 %v63, %v128
    %v130 = vpop.f32.mrf.mxu0
    %v131 = vpop.f32.mrf.mxu0
    %v132 = vadd.f32 %v63, %v131
    %v133 = vpop.f32.mrf.mxu0
    %134 = vmatprep.mubr.bf16.mxu0 0
    %135 = vmatmul.mubr.bf16.gmra.mxu0 %v92
    %v136 = vpop.f32.mrf.mxu0
    %v137 = vadd.f32 %v63, %v136
    %v138 = vpop.f32.mrf.mxu0
    %v139 = vpop.f32.mrf.mxu0
    %v140 = vadd.f32 %v63, %v139
    %v141 = vpop.f32.mrf.mxu0
    %142 = vdwg.mxu0
    %v143 = vtanh.pop %v129
    %v144 = vtanh.pop %v132
    %v145 = vtanh.pop %v137
    %v146 = vtanh.pop %v140
    %v147 = vlaneseq
    %v148 = vshrl.u32 %v147, 7
    %s149 = smul.u32 0, 8
    %v150 = vstv %s149
    %v151 = vadd.s32 %v148, %v150
    %vm152 = vcmp.gt.s32.totalorder %v151, 0
    %vm153 = vcmp.lt.s32.totalorder %v151, 7
    %vm154 = vmand %vm152, %vm153
    %v155 = vsel %vm154, 1, 0
    %vm156 = vcmp.eq.s32.totalorder %v155, 1
    %v157 = vsel %vm156, %v143, -inf
    %v158 = vsel %vm156, %v144, -inf
    %v159 = vsel %vm156, %v145, -inf
    %v160 = vsel %vm156, %v146, -inf
    %v161 = vsel %vm87, %v157, -inf
    %v162 = vrot.slane %v161, 4
    %v163 = vmax.f32 %v161, %v162
    %v164 = vrot.slane %v163, 2
    %v165 = vmax.f32 %v163, %v164
    %v166 = vrot.slane %v165, 1
    %v167 = vmax.f32 %v165, %v166
    %v168 = vsel %vm87, %v158, -inf
    %v169 = vrot.slane %v168, 4
    %v170 = vmax.f32 %v168, %v169
    %v171 = vrot.slane %v170, 2
    %v172 = vmax.f32 %v170, %v171
    %v173 = vrot.slane %v172, 1
    %v174 = vmax.f32 %v172, %v173
    %v175 = vsel %vm87, %v159, -inf
    %v176 = vrot.slane %v175, 4
    %v177 = vmax.f32 %v175, %v176
    %v178 = vrot.slane %v177, 2
    %v179 = vmax.f32 %v177, %v178
    %v180 = vrot.slane %v179, 1
    %v181 = vmax.f32 %v179, %v180
    %v182 = vsel %vm87, %v160, -inf
    %v183 = vrot.slane %v182, 4
    %v184 = vmax.f32 %v182, %v183
    %v185 = vrot.slane %v184, 2
    %v186 = vmax.f32 %v184, %v185
    %v187 = vrot.slane %v186, 1
    %v188 = vmax.f32 %v186, %v187
    %v189 = vld [vmem:[#allocation2] sm:$0xf]
    %vm194 = vcmask 1041409
    %v195 = vsel %vm194, %v174, %v167
    %vm196 = vcmask 1042434
    %v197 = vsel %vm196, %v181, %v195
    %vm198 = vcmask 1043459
    %v199 = vsel %vm198, %v188, %v197
    %v201 = vmax.f32 %v189, %v199
    %vm202 = vcmask 257024
    %203 = vst.msk [vmem:[#allocation2] sm:$0xf] %vm202, %v201
    // Predicated region
    $region26: #{tpu_custom_call.1} parent=1 // pred_check
      %p204 = pneg %p44
    $region27: #{tpu_custom_call.1} parent=1 // pred_check_branch
      %206 = sbr.rel (%p204) target = $region29
    $region28: #{tpu_custom_call.1} parent=1 // pred_region
      %v207 = vld [vmem:[#allocation2] sm:$0xf]
      %v209 = vrot.slane %v207, 2
      %v211 = vmul.f32 %v207, %v209
      %vm212 = vcmask 254976
      %v213 = vsel %vm212, %v211, 0.0
      %214 = vadd.xlane.f32.xlu0 %v213
      %v215 = vpop.xlane.xlu0 %214
      %v216 = vmul.f32 %v207, %v207
      %v217 = vsel %vm212, %v216, 0.0
      %218 = vadd.xlane.f32.xlu0 %v217
      %v219 = vpop.xlane.xlu0 %218
      %vm220 = vcmask 257026
      %v221 = vsel %vm220, %v216, 0.0
      %222 = vadd.xlane.f32.xlu0 %v221
      %v223 = vpop.xlane.xlu0 %222
      %v225 = vrot.slane %v223, 2
      %v227 = vmul.f32 %v219, %v225
      %v228 = vmax.f32 %v227, 1e-16
      %v229 = vrsqrt.pop %v228
      %v230 = vmul.f32 %v215, %v229
      %232 = vset.pattern.permute.xlu0 0
      %233 = vperm.xlu0 %232, %v230
      %v234 = vpop.permute.xlu0 %233
      %v235 = vlaneseq
      %v236 = vand.u32 %v235, 127
      %v237 = vlaneseq
      %v238 = vshrl.u32 %v237, 7
      %v239 = vsub.s32 %v236, %v238
      %v240 = vrot.slane %v234, %v239
      %vm242 = vcmask 8192
      %243 = vst.msk [vmem:[#allocation8] sm:$0x1] %vm242, %v240
    $region29: #{tpu_custom_call.1} parent=1 // pred_fallthru
      _
    // Predicated region
    $region30: #{tpu_custom_call.1} parent=1 // pred_check
      _
    $region31: #{tpu_custom_call.1} parent=1 // pred_check_branch
      %245 = sbr.rel (0) target = $region33
    $region32: #{tpu_custom_call.1} parent=1 // pred_region
      %s247 = ssub.s32 16, 16
      %248 = vsyncadd [#allocation5], %s247
      %s250 = sshll.u32 [#allocation8], 4
      %s251 = int_to_ptr.vmem [resolvable:$true] %s250
      %253 = dma.vmem_to_hbm [thread:$0]  %s251, 16, %s3, [#allocation5]
    $region33: #{tpu_custom_call.1} parent=1 // pred_fallthru
      _
    // Predicated region
    $region34: #{tpu_custom_call.1} parent=1 // pred_check
      _
    $region35: #{tpu_custom_call.1} parent=1 // pred_check_branch
      %255 = sbr.rel (0) target = $region37
    $region36: #{tpu_custom_call.1} parent=1 // pred_region
      %256 = dma.done [#allocation5], 16
    $region37: #{tpu_custom_call.1} parent=1 // pred_fallthru
      _
    %257 = vsyncpa [#allocation4], 1
    %258 = vsyncpa [#allocation7], 1
    %259 = vsyncpa [#allocation5], 1

// kernel: tpu_custom_call.1
$region0: #{tpu_custom_call.1}
  #allocation0 [shape = 'u32[]', space=smem, size = 0x4, offset = 0x4, fixed_abs, tag = 'smem constant byte address 0x4 - core index']
  #allocation1 [shape = 'u32[144,128]{1,0:T(1,128)}', space=vmem, size = 0x12000, scoped, tag = 'internal scratch']
  #allocation2 [shape = 'f32[4,32]{1,0:T(4,128)}', space=vmem, size = 0x800, scoped, tag = 'scratch operand']
  %s0 = inlined_call_operand.hbm [shape: bf16[2,2,8,32], index: 0, kind: input, shape index: {}]
  %s1 = inlined_call_operand.hbm [shape: bf16[32,32], index: 1, kind: input, shape index: {}]
  %s2 = inlined_call_operand.vmem [shape: f32[1,32], index: 2, kind: input, shape index: {}]
  %s3 = inlined_call_operand.hbm [shape: f32[1,1,2], index: 3, kind: output, shape index: {}]
  %s4 = sld [smem:[#allocation0]]
  $region38: #{tpu_custom_call.1} parent=0
    _
  %s6 = ssub.s32 1, %s4
  %s7 = scalar_select 0, %s6, %s4
  $region1: #{tpu_custom_call.1} parent=0
    #allocation3 [shape = 'u8[8192]{0}', space=vmem, size = 0x2000, scoped, tag = 'input window, operand 0, single buffered']
    #allocation4 [shape = 's32[1]{0}', space=sflag, size = 0x4, scoped, tag = 'scoped memory for tpu_custom_call.1']
    #allocation5 [shape = 's32[1]{0}', space=sflag, size = 0x4, scoped, tag = 'scoped memory for tpu_custom_call.1']
    #allocation6 [shape = 'u8[8192]{0}', space=vmem, size = 0x2000, scoped, tag = 'input window, operand 1, single buffered']
    #allocation7 [shape = 's32[1]{0}', space=sflag, size = 0x4, scoped, tag = 'scoped memory for tpu_custom_call.1']
    #allocation8 [shape = 'u8[512]{0}', space=vmem, size = 0x400, scoped, tag = 'output window, operand 0, single buffered']
    %8 = vsyncpa [#allocation4], 0
    %9 = vsyncpa [#allocation7], 0
    %10 = vsyncpa [#allocation5], 0
    // Predicated region
    $region2: #{tpu_custom_call.1} parent=1 // pred_check
      _
    $region3: #{tpu_custom_call.1} parent=1 // pred_check_branch
      %12 = sbr.rel (0) target = $region5
    $region4: #{tpu_custom_call.1} parent=1 // pred_region
      %s14 = ssub.s32 256, 256
      %15 = vsyncadd [#allocation4], %s14
      %s16 = sshll.u32 [#allocation3], 4
      %s17 = int_to_ptr.vmem [resolvable:$true] %s16
      %22 = dma.hbm_to_vmem [thread:$0]  %s0, 256, %s17, [#allocation4], 64, 64, 4
    $region5: #{tpu_custom_call.1} parent=1 // pred_fallthru
      _
    // Predicated region
    $region6: #{tpu_custom_call.1} parent=1 // pred_check
      _
    $region7: #{tpu_custom_call.1} parent=1 // pred_check_branch
      %24 = sbr.rel (0) target = $region9
    $region8: #{tpu_custom_call.1} parent=1 // pred_region
      %s26 = ssub.s32 256, 256
      %27 = vsyncadd [#allocation7], %s26
      %s28 = sshll.u32 [#allocation6], 4
      %s29 = int_to_ptr.vmem [resolvable:$true] %s28
      %34 = dma.hbm_to_vmem [thread:$0]  %s1, 256, %s29, [#allocation7], 64, 64, 4
    $region9: #{tpu_custom_call.1} parent=1 // pred_fallthru
      _
    // Predicated region
    $region10: #{tpu_custom_call.1} parent=1 // pred_check
      _
    $region11: #{tpu_custom_call.1} parent=1 // pred_check_branch
      %36 = sbr.rel (0) target = $region13
    $region12: #{tpu_custom_call.1} parent=1 // pred_region
      _
    $region13: #{tpu_custom_call.1} parent=1 // pred_fallthru
      _
    // Predicated region
    $region14: #{tpu_custom_call.1} parent=1 // pred_check
      _
    $region15: #{tpu_custom_call.1} parent=1 // pred_check_branch
      %38 = sbr.rel (0) target = $region17
    $region16: #{tpu_custom_call.1} parent=1 // pred_region
      %39 = dma.done [#allocation4], 256
    $region17: #{tpu_custom_call.1} parent=1 // pred_fallthru
      _
    // Predicated region
    $region18: #{tpu_custom_call.1} parent=1 // pred_check
      _
    $region19: #{tpu_custom_call.1} parent=1 // pred_check_branch
      %41 = sbr.rel (0) target = $region21
    $region20: #{tpu_custom_call.1} parent=1 // pred_region
      %42 = dma.done [#allocation7], 256
    $region21: #{tpu_custom_call.1} parent=1 // pred_fallthru
      _
    %p44 = scmp.eq.s32.totalorder 0, 0
    // Predicated region
    $region22: #{tpu_custom_call.1} parent=1 // pred_check
      %p45 = pneg %p44
    $region23: #{tpu_custom_call.1} parent=1 // pred_check_branch
      %47 = sbr.rel (%p45) target = $region25
    $region24: #{tpu_custom_call.1} parent=1 // pred_region
      %vm48 = vcmask 257024
      %49 = vst.msk [vmem:[#allocation2] sm:$0xf] %vm48, -inf
    $region25: #{tpu_custom_call.1} parent=1 // pred_fallthru
      _
    %v50 = vld [vmem:[#allocation3] sm:$0xf]
    %v51 = vld [vmem:[#allocation3 + $0x4] sm:$0xf]
    %v52 = vld [vmem:[#allocation3 + $0x8] sm:$0xf]
    %v53 = vld [vmem:[#allocation3 + $0xc] sm:$0xf]
    %v54 = vld [vmem:[#allocation6] sm:$0xf]
    %v55 = vld [vmem:[#allocation6 + $0x4] sm:$0xf]
    %v56 = vld [vmem:[#allocation6 + $0x8] sm:$0xf]
    %v57 = vld [vmem:[#allocation6 + $0xc] sm:$0xf]
    %v58 = vld [vmem:[%s2] sm:$0x1]
    %v60 = vlaneseq
    %v61 = vshrl.u32 %v60, 7
    %v62 = vsub.s32 0, %v61
    %v63 = vrot.slane %v58, %v62
    %v69 = vunpack.c.l.b16 %v50
    %v70 = vunpack.c.l.b16 %v51
    %v71 = vunpack.c.l.b16 %v52
    %v72 = vunpack.c.l.b16 %v53
    %v73 = vpack.c.b16 %v70, %v69
    %v74 = vpack.c.b16 %v72, %v71
    %v79 = vunpack.c.l.b16 %v54
    %v80 = vunpack.c.l.b16 %v55
    %v81 = vunpack.c.l.b16 %v56
    %v82 = vunpack.c.l.b16 %v57
    %v83 = vpack.c.b16 %v80, %v79
    %v84 = vpack.c.b16 %v82, %v81
    %vm87 = vcmask 261120
    %v89 = vsel %vm87, %v73, 0
    %v92 = vsel %vm87, %v74, 0
    %94 = vmatprep.subr.bf16.mxu0 0
    %95 = vmatpush1.bf16.msra.mxu0 0
    %96 = vmatprep.subr.bf16.mxu0 0
    %97 = vmatpush1.bf16.msra.mxu0 0
    %98 = vmatprep.subr.bf16.mxu0 0
    %99 = vmatpush1.bf16.msra.mxu0 0
    %100 = vmatprep.subr.bf16.mxu0 0
    %101 = vmatpush1.bf16.msra.mxu0 0
    %102 = vmatprep.subr.bf16.mxu0 0
    %103 = vmatpush1.bf16.msra.mxu0 0
    %104 = vmatprep.subr.bf16.mxu0 0
    %105 = vmatpush1.bf16.msra.mxu0 0
    %106 = vmatprep.subr.bf16.mxu0 0
    %107 = vmatpush1.bf16.msra.mxu0 %v84
    %108 = vmatprep.subr.bf16.mxu0 0
    %109 = vmatpush1.bf16.msra.mxu0 %v83
    %110 = vmatprep.subr.bf16.mxu0 0
    %111 = vmatpush2.bf16.msra.mxu0 0
    %112 = vmatprep.subr.bf16.mxu0 0
    %113 = vmatpush2.bf16.msra.mxu0 0
    %114 = vmatprep.subr.bf16.mxu0 0
    %115 = vmatpush2.bf16.msra.mxu0 0
    %116 = vmatprep.subr.bf16.mxu0 0
    %117 = vmatpush2.bf16.msra.mxu0 0
    %118 = vmatprep.subr.bf16.mxu0 0
    %119 = vmatpush2.bf16.msra.mxu0 0
    %120 = vmatprep.subr.bf16.mxu0 0
    %121 = vmatpush2.bf16.msra.mxu0 0
    %122 = vmatprep.subr.bf16.mxu0 0
    %123 = vmatpush2.bf16.msra.mxu0 0
    %124 = vmatprep.subr.bf16.mxu0 0
    %125 = vmatpush2.bf16.msra.mxu0 0
    %126 = vmatprep.mubr.bf16.mxu0 0
    %127 = vmatmul.mubr.bf16.gmra.mxu0 %v89
    %v128 = vpop.f32.mrf.mxu0
    %v129 = vadd.f32 %v63, %v128
    %v130 = vpop.f32.mrf.mxu0
    %v131 = vpop.f32.mrf.mxu0
    %v132 = vadd.f32 %v63, %v131
    %v133 = vpop.f32.mrf.mxu0
    %134 = vmatprep.mubr.bf16.mxu0 0
    %135 = vmatmul.mubr.bf16.gmra.mxu0 %v92
    %v136 = vpop.f32.mrf.mxu0
    %v137 = vadd.f32 %v63, %v136
    %v138 = vpop.f32.mrf.mxu0
    %v139 = vpop.f32.mrf.mxu0
    %v140 = vadd.f32 %v63, %v139
    %v141 = vpop.f32.mrf.mxu0
    %142 = vdwg.mxu0
    %v143 = vtanh.pop %v129
    %v144 = vtanh.pop %v132
    %v145 = vtanh.pop %v137
    %v146 = vtanh.pop %v140
    %v147 = vlaneseq
    %v148 = vshrl.u32 %v147, 7
    %s149 = smul.u32 0, 8
    %v150 = vstv %s149
    %v151 = vadd.s32 %v148, %v150
    %vm152 = vcmp.gt.s32.totalorder %v151, 0
    %vm153 = vcmp.lt.s32.totalorder %v151, 7
    %vm154 = vmand %vm152, %vm153
    %v155 = vsel %vm154, 1, 0
    %vm156 = vcmp.eq.s32.totalorder %v155, 1
    %v157 = vsel %vm156, %v143, -inf
    %v158 = vsel %vm156, %v144, -inf
    %v159 = vsel %vm156, %v145, -inf
    %v160 = vsel %vm156, %v146, -inf
    %v161 = vsel %vm87, %v157, -inf
    %v162 = vrot.slane %v161, 4
    %v163 = vmax.f32 %v161, %v162
    %v164 = vrot.slane %v163, 2
    %v165 = vmax.f32 %v163, %v164
    %v166 = vrot.slane %v165, 1
    %v167 = vmax.f32 %v165, %v166
    %v168 = vsel %vm87, %v158, -inf
    %v169 = vrot.slane %v168, 4
    %v170 = vmax.f32 %v168, %v169
    %v171 = vrot.slane %v170, 2
    %v172 = vmax.f32 %v170, %v171
    %v173 = vrot.slane %v172, 1
    %v174 = vmax.f32 %v172, %v173
    %v175 = vsel %vm87, %v159, -inf
    %v176 = vrot.slane %v175, 4
    %v177 = vmax.f32 %v175, %v176
    %v178 = vrot.slane %v177, 2
    %v179 = vmax.f32 %v177, %v178
    %v180 = vrot.slane %v179, 1
    %v181 = vmax.f32 %v179, %v180
    %v182 = vsel %vm87, %v160, -inf
    %v183 = vrot.slane %v182, 4
    %v184 = vmax.f32 %v182, %v183
    %v185 = vrot.slane %v184, 2
    %v186 = vmax.f32 %v184, %v185
    %v187 = vrot.slane %v186, 1
    %v188 = vmax.f32 %v186, %v187
    %v189 = vld [vmem:[#allocation2] sm:$0xf]
    %vm194 = vcmask 1041409
    %v195 = vsel %vm194, %v174, %v167
    %vm196 = vcmask 1042434
    %v197 = vsel %vm196, %v181, %v195
    %vm198 = vcmask 1043459
    %v199 = vsel %vm198, %v188, %v197
    %v201 = vmax.f32 %v189, %v199
    %vm202 = vcmask 257024
    %203 = vst.msk [vmem:[#allocation2] sm:$0xf] %vm202, %v201
    // Predicated region
    $region26: #{tpu_custom_call.1} parent=1 // pred_check
      %p204 = pneg %p44
    $region27: #{tpu_custom_call.1} parent=1 // pred_check_branch
      %206 = sbr.rel (%p204) target = $region29
    $region28: #{tpu_custom_call.1} parent=1 // pred_region
      %v207 = vld [vmem:[#allocation2] sm:$0xf]
      %v209 = vrot.slane %v207, 2
      %v211 = vmul.f32 %v207, %v209
      %vm212 = vcmask 254976
      %v213 = vsel %vm212, %v211, 0.0
      %214 = vadd.xlane.f32.xlu0 %v213
      %v215 = vpop.xlane.xlu0 %214
      %v216 = vmul.f32 %v207, %v207
      %v217 = vsel %vm212, %v216, 0.0
      %218 = vadd.xlane.f32.xlu0 %v217
      %v219 = vpop.xlane.xlu0 %218
      %vm220 = vcmask 257026
      %v221 = vsel %vm220, %v216, 0.0
      %222 = vadd.xlane.f32.xlu0 %v221
      %v223 = vpop.xlane.xlu0 %222
      %v225 = vrot.slane %v223, 2
      %v227 = vmul.f32 %v219, %v225
      %v228 = vmax.f32 %v227, 1e-16
      %v229 = vrsqrt.pop %v228
      %v230 = vmul.f32 %v215, %v229
      %232 = vset.pattern.permute.xlu0 0
      %233 = vperm.xlu0 %232, %v230
      %v234 = vpop.permute.xlu0 %233
      %v235 = vlaneseq
      %v236 = vand.u32 %v235, 127
      %v237 = vlaneseq
      %v238 = vshrl.u32 %v237, 7
      %v239 = vsub.s32 %v236, %v238
      %v240 = vrot.slane %v234, %v239
      %vm242 = vcmask 8192
      %243 = vst.msk [vmem:[#allocation8] sm:$0x1] %vm242, %v240
    $region29: #{tpu_custom_call.1} parent=1 // pred_fallthru
      _
    // Predicated region
    $region30: #{tpu_custom_call.1} parent=1 // pred_check
      _
    $region31: #{tpu_custom_call.1} parent=1 // pred_check_branch
      %245 = sbr.rel (0) target = $region33
    $region32: #{tpu_custom_call.1} parent=1 // pred_region
      %s247 = ssub.s32 16, 16
      %248 = vsyncadd [#allocation5], %s247
      %s250 = sshll.u32 [#allocation8], 4
      %s251 = int_to_ptr.vmem [resolvable:$true] %s250
      %253 = dma.vmem_to_hbm [thread:$0]  %s251, 16, %s3, [#allocation5]
    $region33: #{tpu_custom_call.1} parent=1 // pred_fallthru
      _
    // Predicated region
    $region34: #{tpu_custom_call.1} parent=1 // pred_check
      _
    $region35: #{tpu_custom_call.1} parent=1 // pred_check_branch
      %255 = sbr.rel (0) target = $region37
    $region36: #{tpu_custom_call.1} parent=1 // pred_region
      %256 = dma.done [#allocation5], 16
    $region37: #{tpu_custom_call.1} parent=1 // pred_fallthru
      _
    %257 = vsyncpa [#allocation4], 1
    %258 = vsyncpa [#allocation7], 1
    %259 = vsyncpa [#allocation5], 1

</llo_original>
